<compile_context>
chip_gen: v5e
topology: v5e:2x2
jax: 0.10.0
libtpu: 0.0.40
codegen_flags: <defaults>
</compile_context>

<pallas_src>
import functools

import jax
import jax.numpy as jnp
import numpy as np
from jax.experimental import pallas as pl
from jax.experimental.pallas import tpu as pltpu


def _cnn_block_kernel(x_ref, w_ref, b_ref, o_ref, *, neg_slope):
    """Single-step kernel: one MXU matmul + row-pair pool + bias + LeakyReLU.

    x_ref: (N*H, KH*W*C_in)      bf16 row-im2col LHS (batch folded into M)
    w_ref: (KH*W*C_in, W*C_out)  bf16 banded weight (kw taps + W-padding baked in)
    b_ref: (1, W*C_out)          f32 bias tiled over w
    o_ref: (N*H//2, W*C_out)     pooled output, lane dense (128 lanes here)
    """
    Mo, WCo = o_ref.shape

    # Convolution: one K = KH*W*C_in matmul (bf16 operands, f32 accumulate).
    acc = jnp.dot(x_ref[...], w_ref[...], preferred_element_type=jnp.float32)

    # MaxPool2d((2,1)) on the raw accumulator (commutes with per-channel bias
    # add and with monotone LeakyReLU) -> half the epilogue work.
    acc = acc.reshape(Mo, 2, WCo)
    pooled = jnp.maximum(acc[:, 0, :], acc[:, 1, :])

    # bias + LeakyReLU (VPU), then lane-dense store.
    y = pooled + b_ref[...]
    y = jnp.maximum(y, neg_slope * y)
    o_ref[...] = y.astype(o_ref.dtype)


def cnn_block(x_nchw, weight_oihw, bias, *, negative_slope=0.01):
    """Pallas implementation of CNN_Block.forward.

    x_nchw:      (N, C_in, H, W)       float32
    weight_oihw: (C_out, C_in, KH, KW) float32  (PyTorch Conv2d layout)
    bias:        (C_out,)              float32
    returns:     (N, C_out, H//2, W)   float32
    """
    N, C_in, H, W = x_nchw.shape
    C_out, _, KH, KW = weight_oihw.shape
    ph, pw = 2, 1                                  # padding=[2,1] as in the module
    assert H % 2 == 0, "MaxPool2d((2,1)) path assumes even H"
    assert negative_slope >= 0, "pool-before-activation requires monotone LeakyReLU"

    Ho = H // 2
    M, K, WCo = N * H, KH * W * C_in, W * C_out

    # --- glue: NCHW -> (N, H, W*C_in), per-image H pad, KH-tap row-im2col ---
    x_rows = jnp.transpose(x_nchw, (0, 2, 3, 1)).reshape(N, H, W * C_in)
    x_rows = jnp.pad(x_rows, ((0, 0), (ph, ph), (0, 0)))        # (N, H+2ph, W*C_in)
    cols = jnp.stack([x_rows[:, kh:kh + H, :] for kh in range(KH)], axis=2)
    lhs = cols.reshape(M, K).astype(jnp.bfloat16)               # (N*H, KH*W*C_in)

    # --- banded weight: B[kh, wi, ci, wo, co] = Wt[co, ci, kh, kw]
    #     iff wi == wo + kw - pw is a valid (unpadded) column; else 0. ---
    w_hwio = jnp.transpose(weight_oihw, (2, 3, 1, 0))           # (KH,KW,C_in,C_out)
    sel = np.zeros((W, KW, W), np.float32)
    for kw in range(KW):
        for wo in range(W):
            wi = wo + kw - pw
            if 0 <= wi < W:
                sel[wi, kw, wo] = 1.0
    banded = jnp.einsum("akb,hkcd->hacbd", jnp.asarray(sel), w_hwio)
    w2d = banded.reshape(K, WCo).astype(jnp.bfloat16)           # (KH*W*C_in, W*C_out)

    b_rows = jnp.tile(bias.astype(jnp.float32), (W,)).reshape(1, WCo)

    kernel = functools.partial(_cnn_block_kernel, neg_slope=negative_slope)

    out = pl.pallas_call(
        kernel,
        out_shape=jax.ShapeDtypeStruct((N * Ho, WCo), x_nchw.dtype),
        grid_spec=pltpu.PrefetchScalarGridSpec(
            num_scalar_prefetch=0,
            grid=(1,),
            in_specs=[
                pl.BlockSpec((M, K), lambda i: (0, 0)),
                pl.BlockSpec((K, WCo), lambda i: (0, 0)),
                pl.BlockSpec((1, WCo), lambda i: (0, 0)),
            ],
            out_specs=pl.BlockSpec((N * Ho, WCo), lambda i: (0, 0)),
        ),
        compiler_params=pltpu.CompilerParams(
            dimension_semantics=("arbitrary",),    # single step; nothing to shard
        ),
    )(lhs, w2d, b_rows)

    # lane-dense kernel output (N*Ho, W*C_out) -> NCHW (tiny tensor).
    # TODO(synk): for production sizes consume/produce NHWC end-to-end so these
    # wrapper transposes (extra HBM round-trips) disappear.
    return jnp.transpose(out.reshape(N, Ho, W, C_out), (0, 3, 1, 2))


def _reference(x_nchw, weight_oihw, bias, negative_slope=0.01):
    """Plain-JAX reference matching PyTorch semantics."""
    y = jax.lax.conv_general_dilated(
        x_nchw, weight_oihw,
        window_strides=(1, 1),
        padding=((2, 2), (1, 1)),
        dimension_numbers=("NCHW", "OIHW", "NCHW"),
    )
    y = y + bias.reshape(1, -1, 1, 1)
    y = jnp.where(y > 0, y, negative_slope * y)
    y = jax.lax.reduce_window(
        y, -jnp.inf, jax.lax.max,
        window_dimensions=(1, 1, 2, 1),
        window_strides=(1, 1, 2, 1),
        padding="VALID",
    )
    return y


if __name__ == "__main__":
    # Small deterministic problem: batch=2, in_channels=4, out_channels=8, 16x16 spatial.
    N, C_in, C_out, H, W = 2, 4, 8, 16, 16
    KH, KW = 5, 3

    key = jax.random.PRNGKey(0)
    kx, kwt, kb = jax.random.split(key, 3)
    x = jax.random.normal(kx, (N, C_in, H, W), dtype=jnp.float32)
    weight = 0.1 * jax.random.normal(kwt, (C_out, C_in, KH, KW), dtype=jnp.float32)
    bias = 0.1 * jax.random.normal(kb, (C_out,), dtype=jnp.float32)

    out = jax.block_until_ready(cnn_block(x, weight, bias, negative_slope=0.01))
    ref = jax.block_until_ready(_reference(x, weight, bias, negative_slope=0.01))

    assert out.shape == (N, C_out, H // 2, W), out.shape
    # bf16 matmul operands with f32 accumulation -> loosened tolerance.
    np.testing.assert_allclose(np.asarray(out), np.asarray(ref), rtol=2e-2, atol=2e-2)

    print("KERNEL_OK")
</pallas_src>

<mosaic_0001>
module attributes {stable_mosaic.version = 11 : i64} {
  func.func @_cnn_block_kernel(%arg0: i32, %arg1: memref<32x320xbf16, #tpu.memory_space<vmem>>, %arg2: memref<320x128xbf16, #tpu.memory_space<vmem>>, %arg3: memref<1x128xf32, #tpu.memory_space<vmem>>, %arg4: memref<16x128xf32, #tpu.memory_space<vmem>>) attributes {dimension_semantics = [#tpu.dimension_semantics<arbitrary>], iteration_bounds = array<i64: 1>, scalar_prefetch = 0 : i64, scratch_operands = 0 : i64, tpu.core_type = #tpu.core_type<tc>, window_params = [{pipeline_mode = #tpu.pipeline_mode<synchronous>, transform_indices = @transform_0, window_bounds = array<i64: 32, 320>}, {pipeline_mode = #tpu.pipeline_mode<synchronous>, transform_indices = @transform_1, window_bounds = array<i64: 320, 128>}, {pipeline_mode = #tpu.pipeline_mode<synchronous>, transform_indices = @transform_2, window_bounds = array<i64: 1, 128>}, {pipeline_mode = #tpu.pipeline_mode<synchronous>, transform_indices = @transform_3, window_bounds = array<i64: 16, 128>}]} {
    %c0 = arith.constant 0 : index
    %c0_0 = arith.constant 0 : index
    %0 = vector.load %arg1[%c0, %c0_0] : memref<32x320xbf16, #tpu.memory_space<vmem>>, vector<32x320xbf16>
    %c0_1 = arith.constant 0 : index
    %c0_2 = arith.constant 0 : index
    %1 = vector.load %arg2[%c0_1, %c0_2] : memref<320x128xbf16, #tpu.memory_space<vmem>>, vector<320x128xbf16>
    %cst = arith.constant dense<0.000000e+00> : vector<32x128xf32>
    %2 = tpu.matmul %0, %1, %cst {dimension_numbers = #tpu.dot_dimension_numbers<[1], [0], [0], [1], [0, 0, 1, 1], [], []>} : vector<32x320xbf16>, vector<320x128xbf16>, vector<32x128xf32> -> vector<32x128xf32>
    %3 = vector.shape_cast %2 : vector<32x128xf32> to vector<16x2x128xf32>
    %4 = vector.extract_strided_slice %3 {offsets = [0, 0, 0], sizes = [16, 1, 128], strides = [1, 1, 1]} : vector<16x2x128xf32> to vector<16x1x128xf32>
    %5 = vector.shape_cast %4 : vector<16x1x128xf32> to vector<16x128xf32>
    %6 = vector.extract_strided_slice %3 {offsets = [0, 1, 0], sizes = [16, 1, 128], strides = [1, 1, 1]} : vector<16x2x128xf32> to vector<16x1x128xf32>
    %7 = vector.shape_cast %6 : vector<16x1x128xf32> to vector<16x128xf32>
    %8 = arith.maximumf %5, %7 : vector<16x128xf32>
    %c0_3 = arith.constant 0 : index
    %c0_4 = arith.constant 0 : index
    %9 = vector.load %arg3[%c0_3, %c0_4] : memref<1x128xf32, #tpu.memory_space<vmem>>, vector<1x128xf32>
    %10 = vector.broadcast %9 : vector<1x128xf32> to vector<16x128xf32>
    %11 = arith.addf %8, %10 : vector<16x128xf32>
    %cst_5 = arith.constant 0.00999999977 : f32
    %12 = vector.broadcast %cst_5 : f32 to vector<16x128xf32>
    %13 = arith.mulf %12, %11 : vector<16x128xf32>
    %14 = arith.maximumf %11, %13 : vector<16x128xf32>
    %c0_6 = arith.constant 0 : index
    %c0_7 = arith.constant 0 : index
    %15 = vector.load %arg4[%c0_6, %c0_7] : memref<16x128xf32, #tpu.memory_space<vmem>>, vector<16x128xf32>
    tpu.vector_store %arg4[%c0_6, %c0_7], %14 {strides = array<i32>} : memref<16x128xf32, #tpu.memory_space<vmem>>, vector<16x128xf32>,
    return
  }
  func.func @transform_0(%arg0: i32) -> (i32, i32) {
    %c0_i32 = arith.constant 0 : i32
    %c0_i32_0 = arith.constant 0 : i32
    %c0_i32_1 = arith.constant 0 : i32
    return %c0_i32, %c0_i32_0 : i32, i32
  }
  func.func @transform_1(%arg0: i32) -> (i32, i32) {
    %c0_i32 = arith.constant 0 : i32
    %c0_i32_0 = arith.constant 0 : i32
    %c0_i32_1 = arith.constant 0 : i32
    return %c0_i32, %c0_i32_0 : i32, i32
  }
  func.func @transform_2(%arg0: i32) -> (i32, i32) {
    %c0_i32 = arith.constant 0 : i32
    %c0_i32_0 = arith.constant 0 : i32
    %c0_i32_1 = arith.constant 0 : i32
    return %c0_i32, %c0_i32_0 : i32, i32
  }
  func.func @transform_3(%arg0: i32) -> (i32, i32) {
    %c0_i32 = arith.constant 0 : i32
    %c0_i32_0 = arith.constant 0 : i32
    %c0_i32_1 = arith.constant 0 : i32
    return %c0_i32, %c0_i32_0 : i32, i32
  }
}

</mosaic_0001>

<llo_original>
// kernel: tpu_custom_call.1
$region0: #{tpu_custom_call.1}
  #allocation0 [shape = 'u32[]', space=smem, size = 0x4, offset = 0x4, fixed_abs, tag = 'smem constant byte address 0x4 - core index']
  #allocation1 [shape = 'u32[72,128]{1,0:T(1,128)}', space=vmem, size = 0x9000, scoped, tag = 'internal scratch']
  %s0 = inlined_call_operand.hbm [shape: bf16[32,320], index: 0, kind: input, shape index: {}]
  %s1 = inlined_call_operand.hbm [shape: bf16[320,128], index: 1, kind: input, shape index: {}]
  %s2 = inlined_call_operand.vmem [shape: f32[1,128], index: 2, kind: input, shape index: {}]
  %s3 = inlined_call_operand.hbm [shape: f32[16,128], index: 3, kind: output, shape index: {}]
  %s4 = sld [smem:[#allocation0]]
  $region30: #{tpu_custom_call.1} parent=0
    _
  %s6 = ssub.s32 1, %s4
  %s7 = scalar_select 0, %s6, %s4
  $region1: #{tpu_custom_call.1} parent=0
    #allocation2 [shape = 'u8[24576]{0}', space=vmem, size = 0x6000, scoped, tag = 'input window, operand 0, single buffered']
    #allocation3 [shape = 's32[1]{0}', space=sflag, size = 0x4, scoped, tag = 'scoped memory for tpu_custom_call.1']
    #allocation4 [shape = 's32[1]{0}', space=sflag, size = 0x4, scoped, tag = 'scoped memory for tpu_custom_call.1']
    #allocation5 [shape = 'u8[81920]{0}', space=vmem, size = 0x14000, scoped, tag = 'input window, operand 1, single buffered']
    #allocation6 [shape = 's32[1]{0}', space=sflag, size = 0x4, scoped, tag = 'scoped memory for tpu_custom_call.1']
    #allocation7 [shape = 'u8[8192]{0}', space=vmem, size = 0x2000, scoped, tag = 'output window, operand 0, single buffered']
    %8 = vsyncpa [#allocation3], 0
    %9 = vsyncpa [#allocation6], 0
    %10 = vsyncpa [#allocation4], 0
    // Predicated region
    $region2: #{tpu_custom_call.1} parent=1 // pred_check
      _
    $region3: #{tpu_custom_call.1} parent=1 // pred_check_branch
      %12 = sbr.rel (0) target = $region5
    $region4: #{tpu_custom_call.1} parent=1 // pred_region
      %14 = vsyncadd [#allocation3], 0
      %s15 = sshll.u32 %s0, 4
      %s16 = int_to_ptr.hbm [resolvable:$true] %s15
      %s17 = sshll.u32 [#allocation2], 4
      %s18 = int_to_ptr.vmem [resolvable:$true] %s17
      %23 = dma.hbm_to_vmem [thread:$0]  %s16, 768, %s18, [#allocation3], 192, 192, 12
    $region5: #{tpu_custom_call.1} parent=1 // pred_fallthru
      _
    // Predicated region
    $region6: #{tpu_custom_call.1} parent=1 // pred_check
      _
    $region7: #{tpu_custom_call.1} parent=1 // pred_check_branch
      %25 = sbr.rel (0) target = $region9
    $region8: #{tpu_custom_call.1} parent=1 // pred_region
      %27 = vsyncadd [#allocation6], 0
      %s28 = sshll.u32 %s1, 4
      %s29 = int_to_ptr.hbm [resolvable:$true] %s28
      %s30 = sshll.u32 [#allocation5], 4
      %s31 = int_to_ptr.vmem [resolvable:$true] %s30
      %36 = dma.hbm_to_vmem [thread:$0]  %s29, 2560, %s31, [#allocation6], 64, 64, 4
    $region9: #{tpu_custom_call.1} parent=1 // pred_fallthru
      _
    // Predicated region
    $region10: #{tpu_custom_call.1} parent=1 // pred_check
      _
    $region11: #{tpu_custom_call.1} parent=1 // pred_check_branch
      %38 = sbr.rel (0) target = $region13
    $region12: #{tpu_custom_call.1} parent=1 // pred_region
      _
    $region13: #{tpu_custom_call.1} parent=1 // pred_fallthru
      _
    // Predicated region
    $region14: #{tpu_custom_call.1} parent=1 // pred_check
      _
    $region15: #{tpu_custom_call.1} parent=1 // pred_check_branch
      %40 = sbr.rel (0) target = $region17
    $region16: #{tpu_custom_call.1} parent=1 // pred_region
      %42 = dma.done [#allocation3], 768
    $region17: #{tpu_custom_call.1} parent=1 // pred_fallthru
      _
    // Predicated region
    $region18: #{tpu_custom_call.1} parent=1 // pred_check
      _
    $region19: #{tpu_custom_call.1} parent=1 // pred_check_branch
      %44 = sbr.rel (0) target = $region21
    $region20: #{tpu_custom_call.1} parent=1 // pred_region
      %46 = dma.done [#allocation6], 2560
    $region21: #{tpu_custom_call.1} parent=1 // pred_fallthru
      _
    %v48 = vld [vmem:[#allocation2] sm:$0xff]
    %v49 = vld [vmem:[#allocation2 + $0x8] sm:$0xf]
    %v50 = vld [vmem:[#allocation2 + $0xc] sm:$0xff]
    %v51 = vld [vmem:[#allocation2 + $0x14] sm:$0xf]
    %v52 = vld [vmem:[#allocation2 + $0x18] sm:$0xff]
    %v53 = vld [vmem:[#allocation2 + $0x20] sm:$0xf]
    %v54 = vld [vmem:[#allocation2 + $0x24] sm:$0xff]
    %v55 = vld [vmem:[#allocation2 + $0x2c] sm:$0xf]
    %v56 = vld [vmem:[#allocation5] sm:$0xf]
    %v57 = vld [vmem:[#allocation5 + $0x4] sm:$0xf]
    %v58 = vld [vmem:[#allocation5 + $0x8] sm:$0xf]
    %v59 = vld [vmem:[#allocation5 + $0xc] sm:$0xf]
    %v60 = vld [vmem:[#allocation5 + $0x10] sm:$0xf]
    %v61 = vld [vmem:[#allocation5 + $0x14] sm:$0xf]
    %v62 = vld [vmem:[#allocation5 + $0x18] sm:$0xf]
    %v63 = vld [vmem:[#allocation5 + $0x1c] sm:$0xf]
    %v64 = vld [vmem:[#allocation5 + $0x20] sm:$0xf]
    %v65 = vld [vmem:[#allocation5 + $0x24] sm:$0xf]
    %v66 = vld [vmem:[#allocation5 + $0x28] sm:$0xf]
    %v67 = vld [vmem:[#allocation5 + $0x2c] sm:$0xf]
    %v68 = vld [vmem:[#allocation5 + $0x30] sm:$0xf]
    %v69 = vld [vmem:[#allocation5 + $0x34] sm:$0xf]
    %v70 = vld [vmem:[#allocation5 + $0x38] sm:$0xf]
    %v71 = vld [vmem:[#allocation5 + $0x3c] sm:$0xf]
    %v72 = vld [vmem:[#allocation5 + $0x40] sm:$0xf]
    %v73 = vld [vmem:[#allocation5 + $0x44] sm:$0xf]
    %v74 = vld [vmem:[#allocation5 + $0x48] sm:$0xf]
    %v75 = vld [vmem:[#allocation5 + $0x4c] sm:$0xf]
    %v76 = vld [vmem:[#allocation5 + $0x50] sm:$0xf]
    %v77 = vld [vmem:[#allocation5 + $0x54] sm:$0xf]
    %v78 = vld [vmem:[#allocation5 + $0x58] sm:$0xf]
    %v79 = vld [vmem:[#allocation5 + $0x5c] sm:$0xf]
    %v80 = vld [vmem:[#allocation5 + $0x60] sm:$0xf]
    %v81 = vld [vmem:[#allocation5 + $0x64] sm:$0xf]
    %v82 = vld [vmem:[#allocation5 + $0x68] sm:$0xf]
    %v83 = vld [vmem:[#allocation5 + $0x6c] sm:$0xf]
    %v84 = vld [vmem:[#allocation5 + $0x70] sm:$0xf]
    %v85 = vld [vmem:[#allocation5 + $0x74] sm:$0xf]
    %v86 = vld [vmem:[#allocation5 + $0x78] sm:$0xf]
    %v87 = vld [vmem:[#allocation5 + $0x7c] sm:$0xf]
    %v88 = vld [vmem:[#allocation5 + $0x80] sm:$0xf]
    %v89 = vld [vmem:[#allocation5 + $0x84] sm:$0xf]
    %v90 = vld [vmem:[#allocation5 + $0x88] sm:$0xf]
    %v91 = vld [vmem:[#allocation5 + $0x8c] sm:$0xf]
    %v92 = vld [vmem:[#allocation5 + $0x90] sm:$0xf]
    %v93 = vld [vmem:[#allocation5 + $0x94] sm:$0xf]
    %v94 = vld [vmem:[#allocation5 + $0x98] sm:$0xf]
    %v95 = vld [vmem:[#allocation5 + $0x9c] sm:$0xf]
    %v104 = vunpack.c.l.b16 %v48
    %v105 = vunpack.c.h.b16 %v48
    %v106 = vunpack.c.l.b16 %v49
    %v107 = vunpack.c.l.b16 %v50
    %v108 = vunpack.c.h.b16 %v50
    %v109 = vunpack.c.l.b16 %v51
    %v110 = vunpack.c.l.b16 %v52
    %v111 = vunpack.c.h.b16 %v52
    %v112 = vunpack.c.l.b16 %v53
    %v113 = vunpack.c.l.b16 %v54
    %v114 = vunpack.c.h.b16 %v54
    %v115 = vunpack.c.l.b16 %v55
    %v116 = vpack.c.b16 %v107, %v104
    %v117 = vpack.c.b16 %v108, %v105
    %v118 = vpack.c.b16 %v109, %v106
    %v119 = vpack.c.b16 %v113, %v110
    %v120 = vpack.c.b16 %v114, %v111
    %v121 = vpack.c.b16 %v115, %v112
    %v166 = vunpack.c.l.b16 %v56
    %v167 = vunpack.c.l.b16 %v57
    %v168 = vunpack.c.l.b16 %v58
    %v169 = vunpack.c.l.b16 %v59
    %v170 = vunpack.c.l.b16 %v60
    %v171 = vunpack.c.l.b16 %v61
    %v172 = vunpack.c.l.b16 %v62
    %v173 = vunpack.c.l.b16 %v63
    %v174 = vunpack.c.l.b16 %v64
    %v175 = vunpack.c.l.b16 %v65
    %v176 = vunpack.c.l.b16 %v66
    %v177 = vunpack.c.l.b16 %v67
    %v178 = vunpack.c.l.b16 %v68
    %v179 = vunpack.c.l.b16 %v69
    %v180 = vunpack.c.l.b16 %v70
    %v181 = vunpack.c.l.b16 %v71
    %v182 = vunpack.c.l.b16 %v72
    %v183 = vunpack.c.l.b16 %v73
    %v184 = vunpack.c.l.b16 %v74
    %v185 = vunpack.c.l.b16 %v75
    %v186 = vunpack.c.l.b16 %v76
    %v187 = vunpack.c.l.b16 %v77
    %v188 = vunpack.c.l.b16 %v78
    %v189 = vunpack.c.l.b16 %v79
    %v190 = vunpack.c.l.b16 %v80
    %v191 = vunpack.c.l.b16 %v81
    %v192 = vunpack.c.l.b16 %v82
    %v193 = vunpack.c.l.b16 %v83
    %v194 = vunpack.c.l.b16 %v84
    %v195 = vunpack.c.l.b16 %v85
    %v196 = vunpack.c.l.b16 %v86
    %v197 = vunpack.c.l.b16 %v87
    %v198 = vunpack.c.l.b16 %v88
    %v199 = vunpack.c.l.b16 %v89
    %v200 = vunpack.c.l.b16 %v90
    %v201 = vunpack.c.l.b16 %v91
    %v202 = vunpack.c.l.b16 %v92
    %v203 = vunpack.c.l.b16 %v93
    %v204 = vunpack.c.l.b16 %v94
    %v205 = vunpack.c.l.b16 %v95
    %v206 = vpack.c.b16 %v167, %v166
    %v207 = vpack.c.b16 %v169, %v168
    %v208 = vpack.c.b16 %v171, %v170
    %v209 = vpack.c.b16 %v173, %v172
    %v210 = vpack.c.b16 %v175, %v174
    %v211 = vpack.c.b16 %v177, %v176
    %v212 = vpack.c.b16 %v179, %v178
    %v213 = vpack.c.b16 %v181, %v180
    %v214 = vpack.c.b16 %v183, %v182
    %v215 = vpack.c.b16 %v185, %v184
    %v216 = vpack.c.b16 %v187, %v186
    %v217 = vpack.c.b16 %v189, %v188
    %v218 = vpack.c.b16 %v191, %v190
    %v219 = vpack.c.b16 %v193, %v192
    %v220 = vpack.c.b16 %v195, %v194
    %v221 = vpack.c.b16 %v197, %v196
    %v222 = vpack.c.b16 %v199, %v198
    %v223 = vpack.c.b16 %v201, %v200
    %v224 = vpack.c.b16 %v203, %v202
    %v225 = vpack.c.b16 %v205, %v204
    %vm246 = vcmask 523264
    %v248 = vsel %vm246, %v118, 0
    %v251 = vsel %vm246, %v121, 0
    %253 = vmatpush.bf16.msra.mxu0 %v213
    %254 = vmatpush.bf16.msra.mxu0 %v212
    %255 = vmatpush.bf16.msra.mxu0 %v211
    %256 = vmatpush.bf16.msra.mxu0 %v210
    %257 = vmatpush.bf16.msra.mxu0 %v209
    %258 = vmatpush.bf16.msra.mxu0 %v208
    %259 = vmatpush.bf16.msra.mxu0 %v207
    %260 = vmatpush.bf16.msra.mxu0 %v206
    %261 = vmatmul.bf16.gmra.mxu0 %v116
    %v262 = vpop.f32.mrf.mxu0
    %v263 = vadd.f32 0.0, %v262
    %v264 = vpop.f32.mrf.mxu0
    %v265 = vadd.f32 0.0, %v264
    %266 = vmatmul.bf16.gmra.mxu0 %v119
    %v267 = vpop.f32.mrf.mxu0
    %v268 = vadd.f32 0.0, %v267
    %v269 = vpop.f32.mrf.mxu0
    %v270 = vadd.f32 0.0, %v269
    %271 = vdwg.mxu0
    %272 = vmatpush.bf16.msra.mxu0 %v221
    %273 = vmatpush.bf16.msra.mxu0 %v220
    %274 = vmatpush.bf16.msra.mxu0 %v219
    %275 = vmatpush.bf16.msra.mxu0 %v218
    %276 = vmatpush.bf16.msra.mxu0 %v217
    %277 = vmatpush.bf16.msra.mxu0 %v216
    %278 = vmatpush.bf16.msra.mxu0 %v215
    %279 = vmatpush.bf16.msra.mxu0 %v214
    %280 = vmatmul.bf16.gmra.mxu0 %v117
    %v281 = vpop.f32.mrf.mxu0
    %v282 = vadd.f32 %v263, %v281
    %v283 = vpop.f32.mrf.mxu0
    %v284 = vadd.f32 %v265, %v283
    %285 = vmatmul.bf16.gmra.mxu0 %v120
    %v286 = vpop.f32.mrf.mxu0
    %v287 = vadd.f32 %v268, %v286
    %v288 = vpop.f32.mrf.mxu0
    %v289 = vadd.f32 %v270, %v288
    %290 = vdwg.mxu0
    %291 = vmatpush.bf16.msra.mxu0 0
    %292 = vmatpush.bf16.msra.mxu0 0
    %293 = vmatpush.bf16.msra.mxu0 0
    %294 = vmatpush.bf16.msra.mxu0 0
    %295 = vmatpush.bf16.msra.mxu0 %v225
    %296 = vmatpush.bf16.msra.mxu0 %v224
    %297 = vmatpush.bf16.msra.mxu0 %v223
    %298 = vmatpush.bf16.msra.mxu0 %v222
    %299 = vmatmul.bf16.gmra.mxu0 %v248
    %v300 = vpop.f32.mrf.mxu0
    %v301 = vadd.f32 %v282, %v300
    %v302 = vpop.f32.mrf.mxu0
    %v303 = vadd.f32 %v284, %v302
    %304 = vmatmul.bf16.gmra.mxu0 %v251
    %v305 = vpop.f32.mrf.mxu0
    %v306 = vadd.f32 %v287, %v305
    %v307 = vpop.f32.mrf.mxu0
    %v308 = vadd.f32 %v289, %v307
    %309 = vdwg.mxu0
    %v314 = vrot.slane %v301, 2
    %v315 = vrot.slane %v301, 4
    %v316 = vrot.slane %v301, 6
    %v317 = vrot.slane %v303, 2
    %v318 = vrot.slane %v303, 4
    %v319 = vrot.slane %v303, 6
    %v320 = vrot.slane %v306, 2
    %v321 = vrot.slane %v306, 4
    %v322 = vrot.slane %v306, 6
    %v323 = vrot.slane %v308, 2
    %v324 = vrot.slane %v308, 4
    %v325 = vrot.slane %v308, 6
    %v338 = vrot.slane %v301, 7
    %v339 = vrot.slane %v338, 2
    %v340 = vrot.slane %v314, 7
    %v341 = vrot.slane %v340, 2
    %v342 = vrot.slane %v315, 7
    %v343 = vrot.slane %v342, 2
    %v344 = vrot.slane %v316, 7
    %v345 = vrot.slane %v344, 2
    %v346 = vrot.slane %v303, 7
    %v347 = vrot.slane %v346, 2
    %v348 = vrot.slane %v317, 7
    %v349 = vrot.slane %v348, 2
    %v350 = vrot.slane %v318, 7
    %v351 = vrot.slane %v350, 2
    %v352 = vrot.slane %v319, 7
    %v353 = vrot.slane %v352, 2
    %v354 = vrot.slane %v306, 7
    %v355 = vrot.slane %v354, 2
    %v356 = vrot.slane %v320, 7
    %v357 = vrot.slane %v356, 2
    %v358 = vrot.slane %v321, 7
    %v359 = vrot.slane %v358, 2
    %v360 = vrot.slane %v322, 7
    %v361 = vrot.slane %v360, 2
    %v362 = vrot.slane %v308, 7
    %v363 = vrot.slane %v362, 2
    %v364 = vrot.slane %v323, 7
    %v365 = vrot.slane %v364, 2
    %v366 = vrot.slane %v324, 7
    %v367 = vrot.slane %v366, 2
    %v368 = vrot.slane %v325, 7
    %v369 = vrot.slane %v368, 2
    %v386 = vmax.f32 %v301, %v339
    %v387 = vmax.f32 %v314, %v341
    %v388 = vmax.f32 %v315, %v343
    %v389 = vmax.f32 %v316, %v345
    %v390 = vmax.f32 %v303, %v347
    %v391 = vmax.f32 %v317, %v349
    %v392 = vmax.f32 %v318, %v351
    %v393 = vmax.f32 %v319, %v353
    %v394 = vmax.f32 %v306, %v355
    %v395 = vmax.f32 %v320, %v357
    %v396 = vmax.f32 %v321, %v359
    %v397 = vmax.f32 %v322, %v361
    %v398 = vmax.f32 %v308, %v363
    %v399 = vmax.f32 %v323, %v365
    %v400 = vmax.f32 %v324, %v367
    %v401 = vmax.f32 %v325, %v369
    %v402 = vld [vmem:[%s2] sm:$0x1]
    %v404 = vperm.slane %v402, 0
    %v405 = vrot.slane %v404, 2
    %v406 = vrot.slane %v404, 4
    %v407 = vrot.slane %v404, 6
    %v408 = vrot.slane %v404, 1
    %v409 = vrot.slane %v405, 1
    %v410 = vrot.slane %v406, 1
    %v411 = vrot.slane %v407, 1
    %v420 = vadd.f32 %v386, %v404
    %v421 = vadd.f32 %v387, %v408
    %v422 = vadd.f32 %v388, %v405
    %v423 = vadd.f32 %v389, %v409
    %v424 = vadd.f32 %v390, %v406
    %v425 = vadd.f32 %v391, %v410
    %v426 = vadd.f32 %v392, %v407
    %v427 = vadd.f32 %v393, %v411
    %v428 = vadd.f32 %v394, %v404
    %v429 = vadd.f32 %v395, %v408
    %v430 = vadd.f32 %v396, %v405
    %v431 = vadd.f32 %v397, %v409
    %v432 = vadd.f32 %v398, %v406
    %v433 = vadd.f32 %v399, %v410
    %v434 = vadd.f32 %v400, %v407
    %v435 = vadd.f32 %v401, %v411
    %v436 = vmul.f32 %v420, 0.01
    %v437 = vmul.f32 %v421, 0.01
    %v438 = vmul.f32 %v422, 0.01
    %v439 = vmul.f32 %v423, 0.01
    %v440 = vmul.f32 %v424, 0.01
    %v441 = vmul.f32 %v425, 0.01
    %v442 = vmul.f32 %v426, 0.01
    %v443 = vmul.f32 %v427, 0.01
    %v444 = vmul.f32 %v428, 0.01
    %v445 = vmul.f32 %v429, 0.01
    %v446 = vmul.f32 %v430, 0.01
    %v447 = vmul.f32 %v431, 0.01
    %v448 = vmul.f32 %v432, 0.01
    %v449 = vmul.f32 %v433, 0.01
    %v450 = vmul.f32 %v434, 0.01
    %v451 = vmul.f32 %v435, 0.01
    %v452 = vmax.f32 %v420, %v436
    %v453 = vmax.f32 %v421, %v437
    %v454 = vmax.f32 %v422, %v438
    %v455 = vmax.f32 %v423, %v439
    %v456 = vmax.f32 %v424, %v440
    %v457 = vmax.f32 %v425, %v441
    %v458 = vmax.f32 %v426, %v442
    %v459 = vmax.f32 %v427, %v443
    %v460 = vmax.f32 %v428, %v444
    %v461 = vmax.f32 %v429, %v445
    %v462 = vmax.f32 %v430, %v446
    %v463 = vmax.f32 %v431, %v447
    %v464 = vmax.f32 %v432, %v448
    %v465 = vmax.f32 %v433, %v449
    %v466 = vmax.f32 %v434, %v450
    %v467 = vmax.f32 %v435, %v451
    %v484 = vperm.slane %v452, 0
    %v485 = vperm.slane %v453, 0
    %v486 = vperm.slane %v454, 0
    %v487 = vperm.slane %v455, 0
    %v488 = vperm.slane %v456, 0
    %v489 = vperm.slane %v457, 0
    %v490 = vperm.slane %v458, 0
    %v491 = vperm.slane %v459, 0
    %v492 = vperm.slane %v460, 0
    %v493 = vperm.slane %v461, 0
    %v494 = vperm.slane %v462, 0
    %v495 = vperm.slane %v463, 0
    %v496 = vperm.slane %v464, 0
    %v497 = vperm.slane %v465, 0
    %v498 = vperm.slane %v466, 0
    %v499 = vperm.slane %v467, 0
    %vm500 = vcmask 1041409
    %v501 = vsel %vm500, %v485, %v484
    %vm502 = vcmask 1042434
    %v503 = vsel %vm502, %v486, %v501
    %vm504 = vcmask 1043459
    %v505 = vsel %vm504, %v487, %v503
    %vm506 = vcmask 1044484
    %v507 = vsel %vm506, %v488, %v505
    %vm508 = vcmask 1045509
    %v509 = vsel %vm508, %v489, %v507
    %vm510 = vcmask 1046534
    %v511 = vsel %vm510, %v490, %v509
    %vm512 = vcmask 1047559
    %v513 = vsel %vm512, %v491, %v511
    %v514 = vsel %vm500, %v493, %v492
    %v515 = vsel %vm502, %v494, %v514
    %v516 = vsel %vm504, %v495, %v515
    %v517 = vsel %vm506, %v496, %v516
    %v518 = vsel %vm508, %v497, %v517
    %v519 = vsel %vm510, %v498, %v518
    %v520 = vsel %vm512, %v499, %v519
    %523 = vst [vmem:[#allocation7] sm:$0xff] %v513
    %524 = vst [vmem:[#allocation7 + $0x8] sm:$0xff] %v520
    // Predicated region
    $region22: #{tpu_custom_call.1} parent=1 // pred_check
      _
    $region23: #{tpu_custom_call.1} parent=1 // pred_check_branch
      %526 = sbr.rel (0) target = $region25
    $region24: #{tpu_custom_call.1} parent=1 // pred_region
      %528 = vsyncadd [#allocation4], 0
      %s529 = sshll.u32 [#allocation7], 4
      %s530 = int_to_ptr.vmem [resolvable:$true] %s529
      %s531 = sshll.u32 %s3, 4
      %s532 = int_to_ptr.hbm [resolvable:$true] %s531
      %537 = dma.vmem_to_hbm [thread:$0]  %s530, 256, %s532, [#allocation4], 128, 128, 8
    $region25: #{tpu_custom_call.1} parent=1 // pred_fallthru
      _
    // Predicated region
    $region26: #{tpu_custom_call.1} parent=1 // pred_check
      _
    $region27: #{tpu_custom_call.1} parent=1 // pred_check_branch
      %539 = sbr.rel (0) target = $region29
    $region28: #{tpu_custom_call.1} parent=1 // pred_region
      %541 = dma.done [#allocation4], 256
    $region29: #{tpu_custom_call.1} parent=1 // pred_fallthru
      _
    %542 = vsyncpa [#allocation3], 1
    %543 = vsyncpa [#allocation6], 1
    %544 = vsyncpa [#allocation4], 1

</llo_original>
